<compile_context>
chip_gen: v5e
topology: v5e:2x2
jax: 0.10.0
libtpu: 0.0.40
codegen_flags: <defaults>
</compile_context>

<pallas_src>
from functools import partial

import numpy as np

import jax
import jax.numpy as jnp
from jax.experimental import pallas as pl
from jax.experimental.pallas import tpu as pltpu


def _upconv_kernel(x_ref, cw_ref, r_ref, b_ref, o_ref, *, k, cout, wo):
    """Fused nearest-upsample + ReflectionPad2d + Conv2d for one batch element.

    x_ref  (1, H, cin*W)            VMEM  input rows, channels packed along lanes
    cw_ref (cin*W, k*cout*wo)       VMEM  column gathers folded with conv weights
    r_ref  (k, ho, H)               VMEM  per-row-tap gather matrices (upsample+reflect+stride)
    b_ref  (1, cout*wo)             VMEM  bias broadcast along lanes (bias[co] repeated wo times)
    o_ref  (1, ho, cout*wo)         VMEM  lane-dense packed output block
    """
    slab = cout * wo

    # One MXU matmul: column gather (upsample + reflect + stride along W) and the full
    # (cin, j-tap) weight contraction, produced lane-dense for all k row taps at once.
    g = jnp.dot(x_ref[0], cw_ref[...], preferred_element_type=jnp.float32)   # (H, k*cout*wo)

    # Row-gather matmuls (upsample + reflect + stride along H, one per row tap); the
    # accumulator lives in vregs and is stored exactly once, lane-dense and unmasked.
    acc = jnp.dot(r_ref[0], g[:, :slab], preferred_element_type=jnp.float32)  # (ho, cout*wo)
    for i in range(1, k):
        acc = acc + jnp.dot(r_ref[i], g[:, i * slab:(i + 1) * slab],
                            preferred_element_type=jnp.float32)

    o_ref[0] = acc + b_ref[...]


def _tap_gather_matrices(h, w, k, stride, upsample, pad):
    """Per-tap 0/1 gather matrices folding nearest upsample + ReflectionPad2d + stride.

    R[i] (ho, h): R[i][p, src_row(p*stride + i)] = 1
    C[j] (w, wo): C[j][src_col(q*stride + j), q] = 1
    so (R[i] @ x @ C[j])[p, q] == upsampled_padded_x[p*stride + i, q*stride + j].
    """
    u = upsample if upsample else 1
    hu, wu = h * u, w * u
    hp, wp = hu + 2 * pad, wu + 2 * pad
    ho = (hp - k) // stride + 1
    wo = (wp - k) // stride + 1

    def src(idx, size_up):
        # Padded (upsampled-coordinate) index -> source index in the ORIGINAL image.
        t = idx - pad
        t = np.where(t < 0, -t, t)                            # reflect low edge (no edge repeat)
        t = np.where(t >= size_up, 2 * (size_up - 1) - t, t)  # reflect high edge
        return t // u                                         # nearest-upsample source pixel

    rows = np.arange(ho)
    cols = np.arange(wo)
    r_mats = np.zeros((k, ho, h), np.float32)
    c_mats = np.zeros((k, w, wo), np.float32)
    for i in range(k):
        r_mats[i, rows, src(rows * stride + i, hu)] = 1.0
    for j in range(k):
        c_mats[j, src(cols * stride + j, wu), cols] = 1.0
    return r_mats, c_mats, ho, wo


def upsample_conv_layer(x, weight, bias, *, kernel_size, stride, upsample=None):
    """Forward pass of UpsampleConvLayer.

    x:      (N, Cin, H, W)  float32, NCHW
    weight: (Cout, Cin, k, k)
    bias:   (Cout,)
    returns (N, Cout, Ho, Wo) float32
    """
    n, cin, h, w = x.shape
    cout = weight.shape[0]
    k = kernel_size
    pad = k // 2

    r_np, c_np, ho, wo = _tap_gather_matrices(h, w, k, stride, upsample, pad)

    x32 = x.astype(jnp.float32)
    # (N, H, cin*W): channels packed along lanes so the channel gather + weight contraction
    # is a single matmul inside the kernel (wrapper-side layout plumbing, not compute).
    x_rows = jnp.transpose(x32, (0, 2, 1, 3)).reshape(n, h, cin * w)

    # Fold the conv weights into the per-tap column gather matrices (weight-only work):
    #   cw_all[ci*W + iw, (i*cout + co)*wo + q] = sum_j weight[co,ci,i,j] * C_j[iw, q]
    cw = jnp.einsum('ocij,jwq->cwioq', weight.astype(jnp.float32), jnp.asarray(c_np))
    cw_all = cw.reshape(cin * w, k * cout * wo)

    r_all = jnp.asarray(r_np)                                              # (k, ho, H)
    bias_lane = jnp.repeat(bias.astype(jnp.float32), wo).reshape(1, cout * wo)

    kernel = partial(_upconv_kernel, k=k, cout=cout, wo=wo)

    out_packed = pl.pallas_call(
        kernel,
        grid=(n,),
        in_specs=[
            pl.BlockSpec((1, h, cin * w), lambda b: (b, 0, 0)),            # per-batch input
            pl.BlockSpec((cin * w, k * cout * wo), lambda b: (0, 0)),      # folded weights
            pl.BlockSpec((k, ho, h), lambda b: (0, 0, 0)),                 # row gathers
            pl.BlockSpec((1, cout * wo), lambda b: (0, 0)),                # lane-broadcast bias
        ],
        out_specs=pl.BlockSpec((1, ho, cout * wo), lambda b: (b, 0, 0)),
        out_shape=jax.ShapeDtypeStruct((n, ho, cout * wo), jnp.float32),
        compiler_params=pltpu.CompilerParams(
            dimension_semantics=("parallel",),          # independent batch elements
        ),
    )(x_rows, cw_all, r_all, bias_lane)

    # (N, ho, cout*wo) lane-dense -> (N, cout, ho, wo) NCHW: wrapper-side layout plumbing.
    return out_packed.reshape(n, ho, cout, wo).transpose(0, 2, 1, 3)


if __name__ == "__main__":
    key = jax.random.PRNGKey(0)

    def run_case(cin, cout, k, stride, upsample, n=2, hw=16):
        kx, kw, kb = jax.random.split(jax.random.fold_in(key, stride), 3)
        x = jax.random.normal(kx, (n, cin, hw, hw), dtype=jnp.float32)

        # Deterministic Conv2d-style init (uniform(-1/sqrt(fan_in), 1/sqrt(fan_in))).
        fan_in = cin * k * k
        bound = 1.0 / (fan_in ** 0.5)
        weight = jax.random.uniform(
            kw, (cout, cin, k, k), minval=-bound, maxval=bound, dtype=jnp.float32)
        bias = jax.random.uniform(
            kb, (cout,), minval=-bound, maxval=bound, dtype=jnp.float32)

        out = upsample_conv_layer(
            x, weight, bias, kernel_size=k, stride=stride, upsample=upsample)
        out = jax.block_until_ready(out)

        # Pure-JAX reference (explicit upsample + reflect pad + XLA conv).
        u = upsample if upsample else 1
        x_up = x if u == 1 else jnp.repeat(jnp.repeat(x, u, axis=2), u, axis=3)
        x_pad = jnp.pad(x_up, ((0, 0), (0, 0), (k // 2, k // 2), (k // 2, k // 2)),
                        mode="reflect")
        ref = jax.lax.conv_general_dilated(
            x_pad, weight, (stride, stride), "VALID",
            dimension_numbers=("NCHW", "OIHW", "NCHW"))
        ref = ref + bias[None, :, None, None]

        assert out.shape == ref.shape, (out.shape, ref.shape)
        err = float(jnp.max(jnp.abs(out - ref)))
        assert jnp.allclose(out, ref, atol=1e-4, rtol=1e-4), err

    # Module config from the demo: in_channels=4, out_channels=8, k=3, stride=1, upsample=2
    run_case(cin=4, cout=8, k=3, stride=1, upsample=2)
    # Review ask: exercise the stride > 1 path as well.
    run_case(cin=4, cout=8, k=3, stride=2, upsample=2)

    print("KERNEL_OK")
</pallas_src>

<mosaic_0001>
module attributes {stable_mosaic.version = 11 : i64} {
  func.func @_upconv_kernel(%arg0: i32, %arg1: memref<1x16x64xf32, #tpu.memory_space<vmem>>, %arg2: memref<64x768xf32, #tpu.memory_space<vmem>>, %arg3: memref<3x32x16xf32, #tpu.memory_space<vmem>>, %arg4: memref<1x256xf32, #tpu.memory_space<vmem>>, %arg5: memref<1x32x256xf32, #tpu.memory_space<vmem>>) attributes {dimension_semantics = [#tpu.dimension_semantics<parallel>], iteration_bounds = array<i64: 2>, scalar_prefetch = 0 : i64, scratch_operands = 0 : i64, tpu.core_type = #tpu.core_type<tc>, window_params = [{transform_indices = @transform_0, window_bounds = array<i64: 1, 16, 64>}, {pipeline_mode = #tpu.pipeline_mode<synchronous>, transform_indices = @transform_1, window_bounds = array<i64: 64, 768>}, {pipeline_mode = #tpu.pipeline_mode<synchronous>, transform_indices = @transform_2, window_bounds = array<i64: 3, 32, 16>}, {pipeline_mode = #tpu.pipeline_mode<synchronous>, transform_indices = @transform_3, window_bounds = array<i64: 1, 256>}, {transform_indices = @transform_4, window_bounds = array<i64: 1, 32, 256>}]} {
    %c0 = arith.constant 0 : index
    %c0_0 = arith.constant 0 : index
    %c0_1 = arith.constant 0 : index
    %0 = vector.load %arg1[%c0, %c0_0, %c0_1] : memref<1x16x64xf32, #tpu.memory_space<vmem>>, vector<1x16x64xf32>
    %1 = vector.shape_cast %0 : vector<1x16x64xf32> to vector<16x64xf32>
    %c0_2 = arith.constant 0 : index
    %c0_3 = arith.constant 0 : index
    %2 = vector.load %arg2[%c0_2, %c0_3] : memref<64x768xf32, #tpu.memory_space<vmem>>, vector<64x768xf32>
    %cst = arith.constant dense<0.000000e+00> : vector<16x768xf32>
    %3 = tpu.matmul %1, %2, %cst {dimension_numbers = #tpu.dot_dimension_numbers<[1], [0], [0], [1], [0, 0, 1, 1], [], []>} : vector<16x64xf32>, vector<64x768xf32>, vector<16x768xf32> -> vector<16x768xf32>
    %c0_4 = arith.constant 0 : index
    %c0_5 = arith.constant 0 : index
    %c0_6 = arith.constant 0 : index
    %4 = vector.load %arg3[%c0_4, %c0_5, %c0_6] : memref<3x32x16xf32, #tpu.memory_space<vmem>>, vector<1x32x16xf32>
    %5 = vector.shape_cast %4 : vector<1x32x16xf32> to vector<32x16xf32>
    %6 = vector.extract_strided_slice %3 {offsets = [0, 0], sizes = [16, 256], strides = [1, 1]} : vector<16x768xf32> to vector<16x256xf32>
    %cst_7 = arith.constant dense<0.000000e+00> : vector<32x256xf32>
    %7 = tpu.matmul %5, %6, %cst_7 {dimension_numbers = #tpu.dot_dimension_numbers<[1], [0], [0], [1], [0, 0, 1, 1], [], []>} : vector<32x16xf32>, vector<16x256xf32>, vector<32x256xf32> -> vector<32x256xf32>
    %c1 = arith.constant 1 : index
    %c0_8 = arith.constant 0 : index
    %c0_9 = arith.constant 0 : index
    %8 = vector.load %arg3[%c1, %c0_8, %c0_9] : memref<3x32x16xf32, #tpu.memory_space<vmem>>, vector<1x32x16xf32>
    %9 = vector.shape_cast %8 : vector<1x32x16xf32> to vector<32x16xf32>
    %10 = vector.extract_strided_slice %3 {offsets = [0, 256], sizes = [16, 256], strides = [1, 1]} : vector<16x768xf32> to vector<16x256xf32>
    %cst_10 = arith.constant dense<0.000000e+00> : vector<32x256xf32>
    %11 = tpu.matmul %9, %10, %cst_10 {dimension_numbers = #tpu.dot_dimension_numbers<[1], [0], [0], [1], [0, 0, 1, 1], [], []>} : vector<32x16xf32>, vector<16x256xf32>, vector<32x256xf32> -> vector<32x256xf32>
    %12 = arith.addf %7, %11 : vector<32x256xf32>
    %c2 = arith.constant 2 : index
    %c0_11 = arith.constant 0 : index
    %c0_12 = arith.constant 0 : index
    %13 = vector.load %arg3[%c2, %c0_11, %c0_12] : memref<3x32x16xf32, #tpu.memory_space<vmem>>, vector<1x32x16xf32>
    %14 = vector.shape_cast %13 : vector<1x32x16xf32> to vector<32x16xf32>
    %15 = vector.extract_strided_slice %3 {offsets = [0, 512], sizes = [16, 256], strides = [1, 1]} : vector<16x768xf32> to vector<16x256xf32>
    %cst_13 = arith.constant dense<0.000000e+00> : vector<32x256xf32>
    %16 = tpu.matmul %14, %15, %cst_13 {dimension_numbers = #tpu.dot_dimension_numbers<[1], [0], [0], [1], [0, 0, 1, 1], [], []>} : vector<32x16xf32>, vector<16x256xf32>, vector<32x256xf32> -> vector<32x256xf32>
    %17 = arith.addf %12, %16 : vector<32x256xf32>
    %c0_14 = arith.constant 0 : index
    %c0_15 = arith.constant 0 : index
    %18 = vector.load %arg4[%c0_14, %c0_15] : memref<1x256xf32, #tpu.memory_space<vmem>>, vector<1x256xf32>
    %19 = vector.broadcast %18 : vector<1x256xf32> to vector<32x256xf32>
    %20 = arith.addf %17, %19 : vector<32x256xf32>
    %c0_16 = arith.constant 0 : index
    %c0_17 = arith.constant 0 : index
    %c0_18 = arith.constant 0 : index
    %21 = vector.load %arg5[%c0_16, %c0_17, %c0_18] : memref<1x32x256xf32, #tpu.memory_space<vmem>>, vector<1x32x256xf32>
    %22 = vector.shape_cast %21 : vector<1x32x256xf32> to vector<32x256xf32>
    %23 = vector.shape_cast %20 : vector<32x256xf32> to vector<1x32x256xf32>
    tpu.vector_store %arg5[%c0_16, %c0_17, %c0_18], %23 {strides = array<i32>} : memref<1x32x256xf32, #tpu.memory_space<vmem>>, vector<1x32x256xf32>,
    return
  }
  func.func @transform_0(%arg0: i32) -> (i32, i32, i32) {
    %c0_i32 = arith.constant 0 : i32
    %c0_i32_0 = arith.constant 0 : i32
    %c0_i32_1 = arith.constant 0 : i32
    return %arg0, %c0_i32, %c0_i32_0 : i32, i32, i32
  }
  func.func @transform_1(%arg0: i32) -> (i32, i32) {
    %c0_i32 = arith.constant 0 : i32
    %c0_i32_0 = arith.constant 0 : i32
    %c0_i32_1 = arith.constant 0 : i32
    return %c0_i32, %c0_i32_0 : i32, i32
  }
  func.func @transform_2(%arg0: i32) -> (i32, i32, i32) {
    %c0_i32 = arith.constant 0 : i32
    %c0_i32_0 = arith.constant 0 : i32
    %c0_i32_1 = arith.constant 0 : i32
    %c0_i32_2 = arith.constant 0 : i32
    return %c0_i32, %c0_i32_0, %c0_i32_1 : i32, i32, i32
  }
  func.func @transform_3(%arg0: i32) -> (i32, i32) {
    %c0_i32 = arith.constant 0 : i32
    %c0_i32_0 = arith.constant 0 : i32
    %c0_i32_1 = arith.constant 0 : i32
    return %c0_i32, %c0_i32_0 : i32, i32
  }
  func.func @transform_4(%arg0: i32) -> (i32, i32, i32) {
    %c0_i32 = arith.constant 0 : i32
    %c0_i32_0 = arith.constant 0 : i32
    %c0_i32_1 = arith.constant 0 : i32
    return %arg0, %c0_i32, %c0_i32_0 : i32, i32, i32
  }
}

</mosaic_0001>

<llo_original>
// kernel: tpu_custom_call.1
$region0: #{tpu_custom_call.1}
  #allocation0 [shape = 'u32[]', space=smem, size = 0x4, offset = 0x4, fixed_abs, tag = 'smem constant byte address 0x4 - core index']
  #allocation1 [shape = 'u32[72,128]{1,0:T(1,128)}', space=vmem, size = 0x9000, scoped, tag = 'internal scratch']
  %s0 = inlined_call_operand.vmem [shape: f32[2,16,64], index: 0, kind: input, shape index: {}]
  %s1 = inlined_call_operand.hbm [shape: f32[64,768], index: 1, kind: input, shape index: {}]
  %s2 = inlined_call_operand.vmem [shape: f32[3,32,16], index: 2, kind: input, shape index: {}]
  %s3 = inlined_call_operand.vmem [shape: f32[1,256], index: 3, kind: input, shape index: {}]
  %s4 = inlined_call_operand.hbm [shape: f32[2,32,256], index: 4, kind: output, shape index: {}]
  %s5 = sld [smem:[#allocation0]]
  $region53: #{tpu_custom_call.1} parent=0
    _
  %s7 = ssub.s32 1, %s5
  %s8 = scalar_select 0, %s7, %s5
  $region1: #{tpu_custom_call.1} parent=0
    #allocation2 [shape = 'u8[196608]{0}', space=vmem, size = 0x30000, scoped, tag = 'input window, operand 1, single buffered']
    #allocation3 [shape = 's32[2]{0}', space=sflag, size = 0x8, scoped, tag = 'scoped memory for tpu_custom_call.1']
    #allocation4 [shape = 's32[2]{0}', space=sflag, size = 0x8, scoped, tag = 'scoped memory for tpu_custom_call.1']
    #allocation5 [shape = 'u8[65536]{0}', space=vmem, size = 0x10000, scoped, tag = 'output window, operand 0']
    %9 = vsyncpa [#allocation3], 0
    %10 = vsyncpa [#allocation4], 0
    %s11 = scalar_lea.sflag [#allocation4], 1
    %12 = vsyncpa %s11, 0
    loop: start=0, step=1, limit=4
    $region2: #{tpu_custom_call.1} parent=1 // loop_pre_header
      _
    $region3: #{tpu_custom_call.1} parent=1 // loop_header
      %s14 = sphi 0, %s18
      %p15 = scmp.ge.s32.totalorder %s14, 4
      %s24 = sphi 0, %s26
      %s27 = sphi 0, %s24
      %s28 = sphi 0, %s27
      %s44 = sphi 0, %s28
      %s48 = sphi 0, %s48
      %s50 = sphi 0, %s48
      %s51 = sphi 0, %s50
      %s65 = sphi 0, %s51
      %s69 = sphi 0, %s69
      %s71 = sphi 0, %s69
      %s72 = sphi 0, %s71
      %s86 = sphi 0, %s72
      %s90 = sphi 0, %s90
      %s92 = sphi 0, %s90
      %s93 = sphi 0, %s92
      %s107 = sphi 0, %s93
      %s113 = sphi 0, %s115
      %s116 = sphi 0, %s113
      %s117 = sphi 0, %s116
      %s133 = sphi 0, %s117
    $region4: #{tpu_custom_call.1} parent=1 // loop_header_branch
      %17 = sbr.rel (%p15) target = $region8
    $region5: #{tpu_custom_call.1} parent=1 // loop_body
      %s19 = ssub.s32 %s14, 1
      %s20 = ssub.s32 %s14, 2
      %s21 = sadd.s32 %s14, 1
      %s22 = ssub.s32 %s14, %s21
      %p23 = scmp.eq.s32.totalorder %s22, 0
      %s25 = sadd.s32 %s24, 1
      %s26 = scalar_select %p23, %s24, %s25
      %p29 = pneg %p23
      %p30 = scmp.eq.s32.totalorder %s14, 1
      %p31 = por %p29, %p30
      %p32 = scmp.ne.s32.totalorder %s24, %s27
      %p33 = scmp.eq.s32.totalorder %s14, 0
      %p34 = por %p32, %p33
      %p35 = scmp.ne.s32.totalorder %s24, %s27
      %p36 = scmp.eq.s32.totalorder %s19, 1
      %p37 = por %p35, %p36
      %p38 = scmp.ne.s32.totalorder %s27, %s28
      %p39 = scmp.eq.s32.totalorder %s19, 0
      %p40 = por %p38, %p39
      %p41 = scmp.ne.s32.totalorder %s27, %s28
      %p42 = scmp.eq.s32.totalorder %s20, 1
      %p43 = por %p41, %p42
      %p45 = scmp.ne.s32.totalorder %s28, %s44
      %p46 = scmp.eq.s32.totalorder %s20, 0
      %p47 = por %p45, %p46
      %s49 = sadd.s32 %s48, 1
      %p52 = scmp.eq.s32.totalorder %s14, 1
      %p53 = scmp.ne.s32.totalorder %s48, %s50
      %p54 = scmp.eq.s32.totalorder %s14, 0
      %p55 = por %p53, %p54
      %p56 = scmp.ne.s32.totalorder %s48, %s50
      %p57 = scmp.eq.s32.totalorder %s19, 1
      %p58 = por %p56, %p57
      %p59 = scmp.ne.s32.totalorder %s50, %s51
      %p60 = scmp.eq.s32.totalorder %s19, 0
      %p61 = por %p59, %p60
      %p62 = scmp.ne.s32.totalorder %s50, %s51
      %p63 = scmp.eq.s32.totalorder %s20, 1
      %p64 = por %p62, %p63
      %p66 = scmp.ne.s32.totalorder %s51, %s65
      %p67 = scmp.eq.s32.totalorder %s20, 0
      %p68 = por %p66, %p67
      %s70 = sadd.s32 %s69, 1
      %p73 = scmp.eq.s32.totalorder %s14, 1
      %p74 = scmp.ne.s32.totalorder %s69, %s71
      %p75 = scmp.eq.s32.totalorder %s14, 0
      %p76 = por %p74, %p75
      %p77 = scmp.ne.s32.totalorder %s69, %s71
      %p78 = scmp.eq.s32.totalorder %s19, 1
      %p79 = por %p77, %p78
      %p80 = scmp.ne.s32.totalorder %s71, %s72
      %p81 = scmp.eq.s32.totalorder %s19, 0
      %p82 = por %p80, %p81
      %p83 = scmp.ne.s32.totalorder %s71, %s72
      %p84 = scmp.eq.s32.totalorder %s20, 1
      %p85 = por %p83, %p84
      %p87 = scmp.ne.s32.totalorder %s72, %s86
      %p88 = scmp.eq.s32.totalorder %s20, 0
      %p89 = por %p87, %p88
      %s91 = sadd.s32 %s90, 1
      %p94 = scmp.eq.s32.totalorder %s14, 1
      %p95 = scmp.ne.s32.totalorder %s90, %s92
      %p96 = scmp.eq.s32.totalorder %s14, 0
      %p97 = por %p95, %p96
      %p98 = scmp.ne.s32.totalorder %s90, %s92
      %p99 = scmp.eq.s32.totalorder %s19, 1
      %p100 = por %p98, %p99
      %p101 = scmp.ne.s32.totalorder %s92, %s93
      %p102 = scmp.eq.s32.totalorder %s19, 0
      %p103 = por %p101, %p102
      %p104 = scmp.ne.s32.totalorder %s92, %s93
      %p105 = scmp.eq.s32.totalorder %s20, 1
      %p106 = por %p104, %p105
      %p108 = scmp.ne.s32.totalorder %s93, %s107
      %p109 = scmp.eq.s32.totalorder %s20, 0
      %p110 = por %p108, %p109
      %s111 = ssub.s32 %s14, %s21
      %p112 = scmp.eq.s32.totalorder %s111, 0
      %s114 = sadd.s32 %s113, 1
      %s115 = scalar_select %p112, %s113, %s114
      %p118 = pneg %p112
      %p119 = scmp.eq.s32.totalorder %s14, 1
      %p120 = por %p118, %p119
      %p121 = scmp.ne.s32.totalorder %s113, %s116
      %p122 = scmp.eq.s32.totalorder %s14, 0
      %p123 = por %p121, %p122
      %p124 = scmp.ne.s32.totalorder %s113, %s116
      %p125 = scmp.eq.s32.totalorder %s19, 1
      %p126 = por %p124, %p125
      %p127 = scmp.ne.s32.totalorder %s116, %s117
      %p128 = scmp.eq.s32.totalorder %s19, 0
      %p129 = por %p127, %p128
      %p130 = scmp.ne.s32.totalorder %s116, %s117
      %p131 = scmp.eq.s32.totalorder %s20, 1
      %p132 = por %p130, %p131
      %p134 = scmp.ne.s32.totalorder %s117, %s133
      %p135 = scmp.eq.s32.totalorder %s20, 0
      %p136 = por %p134, %p135
      %p137 = scmp.le.s32.totalorder 1, %s14
      %p138 = scmp.lt.s32.totalorder %s14, 3
      %p139 = pnand %p137, %p138
      %p140 = pneg %p139
      // Predicated region
      $region9: #{tpu_custom_call.1} parent=5 // pred_check
        _
      $region10: #{tpu_custom_call.1} parent=5 // pred_check_branch
        %142 = sbr.rel (%p139) target = $region12
      $region11: #{tpu_custom_call.1} parent=5 // pred_region
        %s143 = ssub.s32 %s14, 1
        // Predicated region
        $region13: #{tpu_custom_call.1} parent=11 // pred_check
          %p144 = pneg %p61
        $region14: #{tpu_custom_call.1} parent=11 // pred_check_branch
          %146 = sbr.rel (%p144) target = $region16
        $region15: #{tpu_custom_call.1} parent=11 // pred_region
          %148 = vsyncadd [#allocation3], 0
          %s149 = sshll.u32 %s1, 4
          %s150 = int_to_ptr.hbm [resolvable:$true] %s149
          %s151 = sshll.u32 [#allocation2], 4
          %s152 = int_to_ptr.vmem [resolvable:$true] %s151
          %157 = dma.hbm_to_vmem [thread:$0]  %s150, 6144, %s152, [#allocation3], 768, 768, 48
        $region16: #{tpu_custom_call.1} parent=11 // pred_fallthru
          _
        // Predicated region
        $region17: #{tpu_custom_call.1} parent=11 // pred_check
          %p158 = pneg %p82
        $region18: #{tpu_custom_call.1} parent=11 // pred_check_branch
          %160 = sbr.rel (%p158) target = $region20
        $region19: #{tpu_custom_call.1} parent=11 // pred_region
          _
        $region20: #{tpu_custom_call.1} parent=11 // pred_fallthru
          _
        // Predicated region
        $region21: #{tpu_custom_call.1} parent=11 // pred_check
          %p161 = pneg %p103
        $region22: #{tpu_custom_call.1} parent=11 // pred_check_branch
          %163 = sbr.rel (%p161) target = $region24
        $region23: #{tpu_custom_call.1} parent=11 // pred_region
          _
        $region24: #{tpu_custom_call.1} parent=11 // pred_fallthru
          _
      $region12: #{tpu_custom_call.1} parent=5 // pred_fallthru
        _
      %p164 = scmp.lt.s32.totalorder %s14, 2
      // Predicated region
      $region25: #{tpu_custom_call.1} parent=5 // pred_check
        %p165 = pneg %p164
      $region26: #{tpu_custom_call.1} parent=5 // pred_check_branch
        %167 = sbr.rel (%p165) target = $region28
      $region27: #{tpu_custom_call.1} parent=5 // pred_region
        // Predicated region
        $region29: #{tpu_custom_call.1} parent=27 // pred_check
          %p168 = pneg %p34
        $region30: #{tpu_custom_call.1} parent=27 // pred_check_branch
          %170 = sbr.rel (%p168) target = $region32
        $region31: #{tpu_custom_call.1} parent=27 // pred_region
          %p171 = scmp.lt.s32.totalorder %s14, 1
          %s172 = scalar_select %p171, %s14, 1
          %s173 = smul.addr %s172, 2
          %s174 = smul.addr %s173, 8
          %s175 = scalar_lea.vmem %s0, %s174
        $region32: #{tpu_custom_call.1} parent=27 // pred_fallthru
          _
      $region28: #{tpu_custom_call.1} parent=5 // pred_fallthru
        _
      %p176 = scmp.le.s32.totalorder 1, %s14
      %p177 = scmp.lt.s32.totalorder %s14, 3
      %p178 = pnand %p176, %p177
      %p179 = pneg %p178
      // Predicated region
      $region33: #{tpu_custom_call.1} parent=5 // pred_check
        _
      $region34: #{tpu_custom_call.1} parent=5 // pred_check_branch
        %181 = sbr.rel (%p178) target = $region36
      $region35: #{tpu_custom_call.1} parent=5 // pred_region
        %s182 = ssub.s32 %s14, 1
        // Predicated region
        $region37: #{tpu_custom_call.1} parent=35 // pred_check
          %p183 = pneg %p61
        $region38: #{tpu_custom_call.1} parent=35 // pred_check_branch
          %185 = sbr.rel (%p183) target = $region40
        $region39: #{tpu_custom_call.1} parent=35 // pred_region
          %187 = dma.done [#allocation3], 6144
        $region40: #{tpu_custom_call.1} parent=35 // pred_fallthru
          _
        %p188 = scmp.lt.s32.totalorder %s19, 1
        %s189 = scalar_select %p188, %s19, 1
        %s190 = smul.addr %s189, 2
        %s191 = smul.addr %s190, 8
        %s192 = scalar_lea.vmem %s0, %s191
        %p193 = pneg %p40
        %p194 = pneg %p37
        %p195 = pneg %p61
        %p196 = pneg %p58
        %p197 = pneg %p82
        %p198 = pneg %p79
        %p199 = pneg %p103
        %p200 = pneg %p100
        %p201 = pneg %p129
        %p202 = pneg %p126
        %s203 = sand.u32 %s116, 1
        %s204 = scalar_lea.sflag [#allocation4], %s203
        %s205 = sand.u32 %s116, 1
        %s206 = smul.addr %s205, 64
        %s207 = scalar_lea.vmem [#allocation5], %s206
        %p208 = scmp.lt.s32.totalorder %s19, 1
        %s209 = scalar_select %p208, %s19, 1
        %s210 = smul.addr %s209, 2
        %s211 = smul.addr %s210, 8
        %s212 = scalar_lea.vmem %s0, %s211
        %v213 = vld [vmem:[%s212] sm:$0xff]
        %v214 = vld [vmem:[%s212 + $0x8] sm:$0xff]
        %v215 = vld [vmem:[#allocation2] sm:$0xff]
        %v216 = vld [vmem:[#allocation2 + $0x8] sm:$0xff]
        %v217 = vld [vmem:[#allocation2 + $0x10] sm:$0xff]
        %v218 = vld [vmem:[#allocation2 + $0x18] sm:$0xff]
        %v219 = vld [vmem:[#allocation2 + $0x20] sm:$0xff]
        %v220 = vld [vmem:[#allocation2 + $0x28] sm:$0xff]
        %v221 = vld [vmem:[#allocation2 + $0x30] sm:$0xff]
        %v222 = vld [vmem:[#allocation2 + $0x38] sm:$0xff]
        %v223 = vld [vmem:[#allocation2 + $0x40] sm:$0xff]
        %v224 = vld [vmem:[#allocation2 + $0x48] sm:$0xff]
        %v225 = vld [vmem:[#allocation2 + $0x50] sm:$0xff]
        %v226 = vld [vmem:[#allocation2 + $0x58] sm:$0xff]
        %v227 = vld [vmem:[#allocation2 + $0x60] sm:$0xff]
        %v228 = vld [vmem:[#allocation2 + $0x68] sm:$0xff]
        %v229 = vld [vmem:[#allocation2 + $0x70] sm:$0xff]
        %v230 = vld [vmem:[#allocation2 + $0x78] sm:$0xff]
        %v231 = vld [vmem:[#allocation2 + $0x80] sm:$0xff]
        %v232 = vld [vmem:[#allocation2 + $0x88] sm:$0xff]
        %v233 = vld [vmem:[#allocation2 + $0x90] sm:$0xff]
        %v234 = vld [vmem:[#allocation2 + $0x98] sm:$0xff]
        %v235 = vld [vmem:[#allocation2 + $0xa0] sm:$0xff]
        %v236 = vld [vmem:[#allocation2 + $0xa8] sm:$0xff]
        %v237 = vld [vmem:[#allocation2 + $0xb0] sm:$0xff]
        %v238 = vld [vmem:[#allocation2 + $0xb8] sm:$0xff]
        %v239 = vld [vmem:[#allocation2 + $0xc0] sm:$0xff]
        %v240 = vld [vmem:[#allocation2 + $0xc8] sm:$0xff]
        %v241 = vld [vmem:[#allocation2 + $0xd0] sm:$0xff]
        %v242 = vld [vmem:[#allocation2 + $0xd8] sm:$0xff]
        %v243 = vld [vmem:[#allocation2 + $0xe0] sm:$0xff]
        %v244 = vld [vmem:[#allocation2 + $0xe8] sm:$0xff]
        %v245 = vld [vmem:[#allocation2 + $0xf0] sm:$0xff]
        %v246 = vld [vmem:[#allocation2 + $0xf8] sm:$0xff]
        %v247 = vld [vmem:[#allocation2 + $0x100] sm:$0xff]
        %v248 = vld [vmem:[#allocation2 + $0x108] sm:$0xff]
        %v249 = vld [vmem:[#allocation2 + $0x110] sm:$0xff]
        %v250 = vld [vmem:[#allocation2 + $0x118] sm:$0xff]
        %v251 = vld [vmem:[#allocation2 + $0x120] sm:$0xff]
        %v252 = vld [vmem:[#allocation2 + $0x128] sm:$0xff]
        %v253 = vld [vmem:[#allocation2 + $0x130] sm:$0xff]
        %v254 = vld [vmem:[#allocation2 + $0x138] sm:$0xff]
        %v255 = vld [vmem:[#allocation2 + $0x140] sm:$0xff]
        %v256 = vld [vmem:[#allocation2 + $0x148] sm:$0xff]
        %v257 = vld [vmem:[#allocation2 + $0x150] sm:$0xff]
        %v258 = vld [vmem:[#allocation2 + $0x158] sm:$0xff]
        %v259 = vld [vmem:[#allocation2 + $0x160] sm:$0xff]
        %v260 = vld [vmem:[#allocation2 + $0x168] sm:$0xff]
        %v261 = vld [vmem:[#allocation2 + $0x170] sm:$0xff]
        %v262 = vld [vmem:[#allocation2 + $0x178] sm:$0xff]
        %vm263 = vcmask 523264
        %v265 = vsel %vm263, %v213, 0
        %v268 = vsel %vm263, %v214, 0
        %270 = vmatpush.msra.mxu0 0.0
        %271 = vmatpush.msra.mxu0 0.0
        %272 = vmatpush.msra.mxu0 0.0
        %273 = vmatpush.msra.mxu0 0.0
        %274 = vmatpush.msra.mxu0 0.0
        %275 = vmatpush.msra.mxu0 0.0
        %276 = vmatpush.msra.mxu0 0.0
        %277 = vmatpush.msra.mxu0 0.0
        %278 = vmatpush.msra.mxu0 %v257
        %279 = vmatpush.msra.mxu0 %v251
        %280 = vmatpush.msra.mxu0 %v245
        %281 = vmatpush.msra.mxu0 %v239
        %282 = vmatpush.msra.mxu0 %v233
        %283 = vmatpush.msra.mxu0 %v227
        %284 = vmatpush.msra.mxu0 %v221
        %285 = vmatpush.msra.mxu0 %v215
        %286 = vmatmul.f32.gmra.mxu0 %v265
        %v287 = vpop.f32.mrf.mxu0
        %v288 = vadd.f32 0.0, %v287
        %289 = vmatmul.f32.gmra.mxu0 %v268
        %v290 = vpop.f32.mrf.mxu0
        %v291 = vadd.f32 0.0, %v290
        %292 = vdwg.mxu0
        %293 = vmatpush.msra.mxu0 0.0
        %294 = vmatpush.msra.mxu0 0.0
        %295 = vmatpush.msra.mxu0 0.0
        %296 = vmatpush.msra.mxu0 0.0
        %297 = vmatpush.msra.mxu0 0.0
        %298 = vmatpush.msra.mxu0 0.0
        %299 = vmatpush.msra.mxu0 0.0
        %300 = vmatpush.msra.mxu0 0.0
        %301 = vmatpush.msra.mxu0 %v258
        %302 = vmatpush.msra.mxu0 %v252
        %303 = vmatpush.msra.mxu0 %v246
        %304 = vmatpush.msra.mxu0 %v240
        %305 = vmatpush.msra.mxu0 %v234
        %306 = vmatpush.msra.mxu0 %v228
        %307 = vmatpush.msra.mxu0 %v222
        %308 = vmatpush.msra.mxu0 %v216
        %309 = vmatmul.f32.gmra.mxu0 %v265
        %v310 = vpop.f32.mrf.mxu0
        %v311 = vadd.f32 0.0, %v310
        %312 = vmatmul.f32.gmra.mxu0 %v268
        %v313 = vpop.f32.mrf.mxu0
        %v314 = vadd.f32 0.0, %v313
        %315 = vdwg.mxu0
        %316 = vmatpush.msra.mxu0 0.0
        %317 = vmatpush.msra.mxu0 0.0
        %318 = vmatpush.msra.mxu0 0.0
        %319 = vmatpush.msra.mxu0 0.0
        %320 = vmatpush.msra.mxu0 0.0
        %321 = vmatpush.msra.mxu0 0.0
        %322 = vmatpush.msra.mxu0 0.0
        %323 = vmatpush.msra.mxu0 0.0
        %324 = vmatpush.msra.mxu0 %v259
        %325 = vmatpush.msra.mxu0 %v253
        %326 = vmatpush.msra.mxu0 %v247
        %327 = vmatpush.msra.mxu0 %v241
        %328 = vmatpush.msra.mxu0 %v235
        %329 = vmatpush.msra.mxu0 %v229
        %330 = vmatpush.msra.mxu0 %v223
        %331 = vmatpush.msra.mxu0 %v217
        %332 = vmatmul.f32.gmra.mxu0 %v265
        %v333 = vpop.f32.mrf.mxu0
        %v334 = vadd.f32 0.0, %v333
        %335 = vmatmul.f32.gmra.mxu0 %v268
        %v336 = vpop.f32.mrf.mxu0
        %v337 = vadd.f32 0.0, %v336
        %338 = vdwg.mxu0
        %339 = vmatpush.msra.mxu0 0.0
        %340 = vmatpush.msra.mxu0 0.0
        %341 = vmatpush.msra.mxu0 0.0
        %342 = vmatpush.msra.mxu0 0.0
        %343 = vmatpush.msra.mxu0 0.0
        %344 = vmatpush.msra.mxu0 0.0
        %345 = vmatpush.msra.mxu0 0.0
        %346 = vmatpush.msra.mxu0 0.0
        %347 = vmatpush.msra.mxu0 %v260
        %348 = vmatpush.msra.mxu0 %v254
        %349 = vmatpush.msra.mxu0 %v248
        %350 = vmatpush.msra.mxu0 %v242
        %351 = vmatpush.msra.mxu0 %v236
        %352 = vmatpush.msra.mxu0 %v230
        %353 = vmatpush.msra.mxu0 %v224
        %354 = vmatpush.msra.mxu0 %v218
        %355 = vmatmul.f32.gmra.mxu0 %v265
        %v356 = vpop.f32.mrf.mxu0
        %v357 = vadd.f32 0.0, %v356
        %358 = vmatmul.f32.gmra.mxu0 %v268
        %v359 = vpop.f32.mrf.mxu0
        %v360 = vadd.f32 0.0, %v359
        %361 = vdwg.mxu0
        %362 = vmatpush.msra.mxu0 0.0
        %363 = vmatpush.msra.mxu0 0.0
        %364 = vmatpush.msra.mxu0 0.0
        %365 = vmatpush.msra.mxu0 0.0
        %366 = vmatpush.msra.mxu0 0.0
        %367 = vmatpush.msra.mxu0 0.0
        %368 = vmatpush.msra.mxu0 0.0
        %369 = vmatpush.msra.mxu0 0.0
        %370 = vmatpush.msra.mxu0 %v261
        %371 = vmatpush.msra.mxu0 %v255
        %372 = vmatpush.msra.mxu0 %v249
        %373 = vmatpush.msra.mxu0 %v243
        %374 = vmatpush.msra.mxu0 %v237
        %375 = vmatpush.msra.mxu0 %v231
        %376 = vmatpush.msra.mxu0 %v225
        %377 = vmatpush.msra.mxu0 %v219
        %378 = vmatmul.f32.gmra.mxu0 %v265
        %v379 = vpop.f32.mrf.mxu0
        %v380 = vadd.f32 0.0, %v379
        %381 = vmatmul.f32.gmra.mxu0 %v268
        %v382 = vpop.f32.mrf.mxu0
        %v383 = vadd.f32 0.0, %v382
        %384 = vdwg.mxu0
        %385 = vmatpush.msra.mxu0 0.0
        %386 = vmatpush.msra.mxu0 0.0
        %387 = vmatpush.msra.mxu0 0.0
        %388 = vmatpush.msra.mxu0 0.0
        %389 = vmatpush.msra.mxu0 0.0
        %390 = vmatpush.msra.mxu0 0.0
        %391 = vmatpush.msra.mxu0 0.0
        %392 = vmatpush.msra.mxu0 0.0
        %393 = vmatpush.msra.mxu0 %v262
        %394 = vmatpush.msra.mxu0 %v256
        %395 = vmatpush.msra.mxu0 %v250
        %396 = vmatpush.msra.mxu0 %v244
        %397 = vmatpush.msra.mxu0 %v238
        %398 = vmatpush.msra.mxu0 %v232
        %399 = vmatpush.msra.mxu0 %v226
        %400 = vmatpush.msra.mxu0 %v220
        %401 = vmatmul.f32.gmra.mxu0 %v265
        %v402 = vpop.f32.mrf.mxu0
        %v403 = vadd.f32 0.0, %v402
        %404 = vmatmul.f32.gmra.mxu0 %v268
        %v405 = vpop.f32.mrf.mxu0
        %v406 = vadd.f32 0.0, %v405
        %407 = vdwg.mxu0
        %v408 = vld [vmem:[%s2] sm:$0xff]
        %v409 = vld [vmem:[%s2 + $0x8] sm:$0xff]
        %v410 = vld [vmem:[%s2 + $0x10] sm:$0xff]
        %v411 = vld [vmem:[%s2 + $0x18] sm:$0xff]
        %s412 = scalar_lea.vmem %s2, 32
        %v413 = vld [vmem:[%s412] sm:$0xff]
        %v414 = vld [vmem:[%s412 + $0x8] sm:$0xff]
        %v415 = vld [vmem:[%s412 + $0x10] sm:$0xff]
        %v416 = vld [vmem:[%s412 + $0x18] sm:$0xff]
        %vm417 = vcmask 130048
        %v419 = vsel %vm417, %v413, 0
        %v422 = vsel %vm417, %v414, 0
        %v425 = vsel %vm417, %v415, 0
        %v428 = vsel %vm417, %v416, 0
        %430 = vmatpush.msra.mxu0 0.0
        %431 = vmatpush.msra.mxu0 0.0
        %432 = vmatpush.msra.mxu0 0.0
        %433 = vmatpush.msra.mxu0 0.0
        %434 = vmatpush.msra.mxu0 0.0
        %435 = vmatpush.msra.mxu0 0.0
        %436 = vmatpush.msra.mxu0 0.0
        %437 = vmatpush.msra.mxu0 0.0
        %438 = vmatpush.msra.mxu0 0.0
        %439 = vmatpush.msra.mxu0 0.0
        %440 = vmatpush.msra.mxu0 0.0
        %441 = vmatpush.msra.mxu0 0.0
        %442 = vmatpush.msra.mxu0 0.0
        %443 = vmatpush.msra.mxu0 0.0
        %444 = vmatpush.msra.mxu0 %v337
        %445 = vmatpush.msra.mxu0 %v334
        %446 = vmatmul.f32.gmra.mxu0 %v419
        %v447 = vpop.f32.mrf.mxu0
        %v448 = vadd.f32 0.0, %v447
        %449 = vmatmul.f32.gmra.mxu0 %v422
        %v450 = vpop.f32.mrf.mxu0
        %v451 = vadd.f32 0.0, %v450
        %452 = vmatmul.f32.gmra.mxu0 %v425
        %v453 = vpop.f32.mrf.mxu0
        %v454 = vadd.f32 0.0, %v453
        %455 = vmatmul.f32.gmra.mxu0 %v428
        %v456 = vpop.f32.mrf.mxu0
        %v457 = vadd.f32 0.0, %v456
        %458 = vdwg.mxu0
        %459 = vmatpush.msra.mxu0 0.0
        %460 = vmatpush.msra.mxu0 0.0
        %461 = vmatpush.msra.mxu0 0.0
        %462 = vmatpush.msra.mxu0 0.0
        %463 = vmatpush.msra.mxu0 0.0
        %464 = vmatpush.msra.mxu0 0.0
        %465 = vmatpush.msra.mxu0 0.0
        %466 = vmatpush.msra.mxu0 0.0
        %467 = vmatpush.msra.mxu0 0.0
        %468 = vmatpush.msra.mxu0 0.0
        %469 = vmatpush.msra.mxu0 0.0
        %470 = vmatpush.msra.mxu0 0.0
        %471 = vmatpush.msra.mxu0 0.0
        %472 = vmatpush.msra.mxu0 0.0
        %473 = vmatpush.msra.mxu0 %v360
        %474 = vmatpush.msra.mxu0 %v357
        %475 = vmatmul.f32.gmra.mxu0 %v419
        %v476 = vpop.f32.mrf.mxu0
        %v477 = vadd.f32 0.0, %v476
        %478 = vmatmul.f32.gmra.mxu0 %v422
        %v479 = vpop.f32.mrf.mxu0
        %v480 = vadd.f32 0.0, %v479
        %481 = vmatmul.f32.gmra.mxu0 %v425
        %v482 = vpop.f32.mrf.mxu0
        %v483 = vadd.f32 0.0, %v482
        %484 = vmatmul.f32.gmra.mxu0 %v428
        %v485 = vpop.f32.mrf.mxu0
        %v486 = vadd.f32 0.0, %v485
        %487 = vdwg.mxu0
        %v489 = vsel %vm417, %v408, 0
        %v492 = vsel %vm417, %v409, 0
        %v495 = vsel %vm417, %v410, 0
        %v498 = vsel %vm417, %v411, 0
        %500 = vmatpush.msra.mxu0 0.0
        %501 = vmatpush.msra.mxu0 0.0
        %502 = vmatpush.msra.mxu0 0.0
        %503 = vmatpush.msra.mxu0 0.0
        %504 = vmatpush.msra.mxu0 0.0
        %505 = vmatpush.msra.mxu0 0.0
        %506 = vmatpush.msra.mxu0 0.0
        %507 = vmatpush.msra.mxu0 0.0
        %508 = vmatpush.msra.mxu0 0.0
        %509 = vmatpush.msra.mxu0 0.0
        %510 = vmatpush.msra.mxu0 0.0
        %511 = vmatpush.msra.mxu0 0.0
        %512 = vmatpush.msra.mxu0 0.0
        %513 = vmatpush.msra.mxu0 0.0
        %514 = vmatpush.msra.mxu0 %v291
        %515 = vmatpush.msra.mxu0 %v288
        %516 = vmatmul.f32.gmra.mxu0 %v489
        %v517 = vpop.f32.mrf.mxu0
        %v518 = vadd.f32 %v448, %v517
        %519 = vmatmul.f32.gmra.mxu0 %v492
        %v520 = vpop.f32.mrf.mxu0
        %v521 = vadd.f32 %v451, %v520
        %522 = vmatmul.f32.gmra.mxu0 %v495
        %v523 = vpop.f32.mrf.mxu0
        %v524 = vadd.f32 %v454, %v523
        %525 = vmatmul.f32.gmra.mxu0 %v498
        %v526 = vpop.f32.mrf.mxu0
        %v527 = vadd.f32 %v457, %v526
        %528 = vdwg.mxu0
        %529 = vmatpush.msra.mxu0 0.0
        %530 = vmatpush.msra.mxu0 0.0
        %531 = vmatpush.msra.mxu0 0.0
        %532 = vmatpush.msra.mxu0 0.0
        %533 = vmatpush.msra.mxu0 0.0
        %534 = vmatpush.msra.mxu0 0.0
        %535 = vmatpush.msra.mxu0 0.0
        %536 = vmatpush.msra.mxu0 0.0
        %537 = vmatpush.msra.mxu0 0.0
        %538 = vmatpush.msra.mxu0 0.0
        %539 = vmatpush.msra.mxu0 0.0
        %540 = vmatpush.msra.mxu0 0.0
        %541 = vmatpush.msra.mxu0 0.0
        %542 = vmatpush.msra.mxu0 0.0
        %543 = vmatpush.msra.mxu0 %v314
        %544 = vmatpush.msra.mxu0 %v311
        %545 = vmatmul.f32.gmra.mxu0 %v489
        %v546 = vpop.f32.mrf.mxu0
        %v547 = vadd.f32 %v477, %v546
        %548 = vmatmul.f32.gmra.mxu0 %v492
        %v549 = vpop.f32.mrf.mxu0
        %v550 = vadd.f32 %v480, %v549
        %551 = vmatmul.f32.gmra.mxu0 %v495
        %v552 = vpop.f32.mrf.mxu0
        %v553 = vadd.f32 %v483, %v552
        %554 = vmatmul.f32.gmra.mxu0 %v498
        %v555 = vpop.f32.mrf.mxu0
        %v556 = vadd.f32 %v486, %v555
        %557 = vdwg.mxu0
        %s558 = scalar_lea.vmem %s2, 64
        %v559 = vld [vmem:[%s558] sm:$0xff]
        %v560 = vld [vmem:[%s558 + $0x8] sm:$0xff]
        %v561 = vld [vmem:[%s558 + $0x10] sm:$0xff]
        %v562 = vld [vmem:[%s558 + $0x18] sm:$0xff]
        %v564 = vsel %vm417, %v559, 0
        %v567 = vsel %vm417, %v560, 0
        %v570 = vsel %vm417, %v561, 0
        %v573 = vsel %vm417, %v562, 0
        %575 = vmatpush.msra.mxu0 0.0
        %576 = vmatpush.msra.mxu0 0.0
        %577 = vmatpush.msra.mxu0 0.0
        %578 = vmatpush.msra.mxu0 0.0
        %579 = vmatpush.msra.mxu0 0.0
        %580 = vmatpush.msra.mxu0 0.0
        %581 = vmatpush.msra.mxu0 0.0
        %582 = vmatpush.msra.mxu0 0.0
        %583 = vmatpush.msra.mxu0 0.0
        %584 = vmatpush.msra.mxu0 0.0
        %585 = vmatpush.msra.mxu0 0.0
        %586 = vmatpush.msra.mxu0 0.0
        %587 = vmatpush.msra.mxu0 0.0
        %588 = vmatpush.msra.mxu0 0.0
        %589 = vmatpush.msra.mxu0 %v383
        %590 = vmatpush.msra.mxu0 %v380
        %591 = vmatmul.f32.gmra.mxu0 %v564
        %v592 = vpop.f32.mrf.mxu0
        %v593 = vadd.f32 0.0, %v592
        %594 = vmatmul.f32.gmra.mxu0 %v567
        %v595 = vpop.f32.mrf.mxu0
        %v596 = vadd.f32 0.0, %v595
        %597 = vmatmul.f32.gmra.mxu0 %v570
        %v598 = vpop.f32.mrf.mxu0
        %v599 = vadd.f32 0.0, %v598
        %600 = vmatmul.f32.gmra.mxu0 %v573
        %v601 = vpop.f32.mrf.mxu0
        %v602 = vadd.f32 0.0, %v601
        %603 = vdwg.mxu0
        %604 = vmatpush.msra.mxu0 0.0
        %605 = vmatpush.msra.mxu0 0.0
        %606 = vmatpush.msra.mxu0 0.0
        %607 = vmatpush.msra.mxu0 0.0
        %608 = vmatpush.msra.mxu0 0.0
        %609 = vmatpush.msra.mxu0 0.0
        %610 = vmatpush.msra.mxu0 0.0
        %611 = vmatpush.msra.mxu0 0.0
        %612 = vmatpush.msra.mxu0 0.0
        %613 = vmatpush.msra.mxu0 0.0
        %614 = vmatpush.msra.mxu0 0.0
        %615 = vmatpush.msra.mxu0 0.0
        %616 = vmatpush.msra.mxu0 0.0
        %617 = vmatpush.msra.mxu0 0.0
        %618 = vmatpush.msra.mxu0 %v406
        %619 = vmatpush.msra.mxu0 %v403
        %620 = vmatmul.f32.gmra.mxu0 %v564
        %v621 = vpop.f32.mrf.mxu0
        %v622 = vadd.f32 0.0, %v621
        %623 = vmatmul.f32.gmra.mxu0 %v567
        %v624 = vpop.f32.mrf.mxu0
        %v625 = vadd.f32 0.0, %v624
        %626 = vmatmul.f32.gmra.mxu0 %v570
        %v627 = vpop.f32.mrf.mxu0
        %v628 = vadd.f32 0.0, %v627
        %629 = vmatmul.f32.gmra.mxu0 %v573
        %v630 = vpop.f32.mrf.mxu0
        %v631 = vadd.f32 0.0, %v630
        %632 = vdwg.mxu0
        %v633 = vadd.f32 %v518, %v593
        %v634 = vadd.f32 %v547, %v622
        %v635 = vadd.f32 %v521, %v596
        %v636 = vadd.f32 %v550, %v625
        %v637 = vadd.f32 %v524, %v599
        %v638 = vadd.f32 %v553, %v628
        %v639 = vadd.f32 %v527, %v602
        %v640 = vadd.f32 %v556, %v631
        %v641 = vld [vmem:[%s3] sm:$0x3]
        %v643 = vperm.slane %v641, 0
        %v644 = vperm.slane %v641, 1
        %v647 = vadd.f32 %v633, %v643
        %v648 = vadd.f32 %v634, %v644
        %v649 = vadd.f32 %v635, %v643
        %v650 = vadd.f32 %v636, %v644
        %v651 = vadd.f32 %v637, %v643
        %v652 = vadd.f32 %v638, %v644
        %v653 = vadd.f32 %v639, %v643
        %v654 = vadd.f32 %v640, %v644
        %655 = vst [vmem:[%s207] sm:$0xff] %v647
        %656 = vst [vmem:[%s207 + $0x8] sm:$0xff] %v648
        %657 = vst [vmem:[%s207 + $0x10] sm:$0xff] %v649
        %658 = vst [vmem:[%s207 + $0x18] sm:$0xff] %v650
        %659 = vst [vmem:[%s207 + $0x20] sm:$0xff] %v651
        %660 = vst [vmem:[%s207 + $0x28] sm:$0xff] %v652
        %661 = vst [vmem:[%s207 + $0x30] sm:$0xff] %v653
        %662 = vst [vmem:[%s207 + $0x38] sm:$0xff] %v654
        %s663 = sand.u32 %s116, 1
        %s664 = scalar_lea.sflag [#allocation4], %s663
        %s665 = sand.u32 %s116, 1
        %s666 = smul.addr %s665, 64
        %s667 = scalar_lea.vmem [#allocation5], %s666
        // Predicated region
        $region41: #{tpu_custom_call.1} parent=35 // pred_check
          %p668 = pneg %p126
        $region42: #{tpu_custom_call.1} parent=35 // pred_check_branch
          %670 = sbr.rel (%p668) target = $region44
        $region43: #{tpu_custom_call.1} parent=35 // pred_region
          %672 = vsyncadd %s664, 0
          %s673 = smul.addr %s19, 8
          %s674 = smul.addr %s673, 8
          %s675 = scalar_lea.hbm %s4, %s674
          %s676 = sshll.u32 %s667, 4
          %s677 = int_to_ptr.vmem [resolvable:$true] %s676
          %s678 = sshll.u32 %s675, 4
          %s679 = int_to_ptr.hbm [resolvable:$true] %s678
          %684 = dma.vmem_to_hbm [thread:$0]  %s677, 1024, %s679, %s664, 256, 256, 16
        $region44: #{tpu_custom_call.1} parent=35 // pred_fallthru
          _
      $region36: #{tpu_custom_call.1} parent=5 // pred_fallthru
        _
      %p685 = scmp.le.s32.totalorder 2, %s14
      // Predicated region
      $region45: #{tpu_custom_call.1} parent=5 // pred_check
        %p686 = pneg %p685
      $region46: #{tpu_custom_call.1} parent=5 // pred_check_branch
        %688 = sbr.rel (%p686) target = $region48
      $region47: #{tpu_custom_call.1} parent=5 // pred_region
        %s689 = ssub.s32 %s14, 2
        // Predicated region
        $region49: #{tpu_custom_call.1} parent=47 // pred_check
          %p690 = pneg %p132
        $region50: #{tpu_custom_call.1} parent=47 // pred_check_branch
          %692 = sbr.rel (%p690) target = $region52
        $region51: #{tpu_custom_call.1} parent=47 // pred_region
          %s693 = sand.u32 %s117, 1
          %s694 = scalar_lea.sflag [#allocation4], %s693
          %s695 = sand.u32 %s117, 1
          %s696 = smul.addr %s695, 64
          %s697 = scalar_lea.vmem [#allocation5], %s696
          %699 = dma.done %s694, 1024
        $region52: #{tpu_custom_call.1} parent=47 // pred_fallthru
          _
      $region48: #{tpu_custom_call.1} parent=5 // pred_fallthru
        _
    $region6: #{tpu_custom_call.1} parent=1 // loop_footer
      %s18 = sadd.s32 1, %s14
    $region7: #{tpu_custom_call.1} parent=1 // loop_footer_branch
      %13 = sbr.rel target = $region3
    $region8: #{tpu_custom_call.1} parent=1 // loop_exit
      _
    %700 = vsyncpa [#allocation3], 1
    %s701 = scalar_lea.sflag [#allocation3], 1
    %702 = vsyncpa %s701, 1
    %703 = vsyncpa [#allocation4], 1
    %s704 = scalar_lea.sflag [#allocation4], 1
    %705 = vsyncpa %s704, 1

</llo_original>
